<compile_context>
chip_gen: v7x
topology: tpu7x:2x2x1
jax: 0.10.0
libtpu: 0.0.40
codegen_flags: <defaults>
</compile_context>

<pallas_src>
import jax
import jax.numpy as jnp
from jax.experimental import pallas as pl
from jax.experimental.pallas import tpu as pltpu

LANE = 128
_TARGET_TOTAL_STEPS = 32   # aim for ~16 reduction steps per partial-sum half
_MAX_BLOCK_ROWS = 2048     # f32: 2 (dbl buf) * 5 * 2048 * 128 * 4 B ~= 10.5 MiB


def _round_up(a, b):
    return -(-a // b) * b


def _mpjpe2d_kernel(data_ref, acc_ref):
    # data_ref: [5, tr, 128] (planes: px, py, gx, gy, conf) in VMEM
    # acc_ref : [1, 8, 128] f32 partial-sum block, resident across the inner axis
    @pl.when(pl.program_id(1) == 0)
    def _():
        acc_ref[...] = jnp.zeros_like(acc_ref)

    px = data_ref[0].astype(jnp.float32)   # [tr, 128] full-occupancy vregs
    py = data_ref[1].astype(jnp.float32)
    gx = data_ref[2].astype(jnp.float32)
    gy = data_ref[3].astype(jnp.float32)
    cf = data_ref[4].astype(jnp.float32)

    dx = px - gx
    dy = py - gy
    # sqrt( (dx^2 + dy^2) * conf ) -- exactly the PyTorch expression.
    per_joint = jnp.sqrt((dx * dx + dy * dy) * cf)            # [tr, 128]

    # Pure-VPU partial reduce: group rows into 8-sublane tiles and add the
    # tiles elementwise. The only cross-lane reduce happens once, in the
    # wrapper, after the grid finishes.
    tr = per_joint.shape[0]
    partial = jnp.sum(per_joint.reshape(tr // 8, 8, LANE), axis=0)   # [8, 128]
    acc_ref[...] += partial[None, :, :]


def mpjpe_2d_pallas(x, y):
    """x: [b, f, j, 2] predictions; y: [b, f, j, 3] gt (x, y, conf) -> f32 scalar."""
    b, f, j, d = x.shape
    assert d == 2, "MPJPE_2D expects 2-D predicted joints"
    assert y.shape == (b, f, j, 3), "gt must be [b, f, j, 3] (x, y, conf)"
    n = b * f * j

    in_dtype = jnp.promote_types(x.dtype, y.dtype)
    itemsize = jnp.dtype(in_dtype).itemsize
    # Sublane granularity for the packed dtype (f32: 8, bf16/f16: 16, 8-bit: 32).
    row_mult = max(8, 32 // max(itemsize, 1))

    # Adaptive tiling: ~_TARGET_TOTAL_STEPS grid steps, VMEM-capped block.
    rows = _round_up(n, LANE) // LANE                       # 128-lane rows of joints
    tr = _round_up(max(1, -(-rows // _TARGET_TOTAL_STEPS)), row_mult)
    tr = min(tr, _MAX_BLOCK_ROWS)
    padded_rows = _round_up(rows, 2 * tr)                   # 2 partial-sum halves
    total_blocks = padded_rows // tr
    steps_per_core = total_blocks // 2
    padded = padded_rows * LANE

    # Single fused producer of the packed [5, rows, 128] plane layout: write the
    # (transposed) pred / gt planes into one pre-sized zero buffer; padding lanes
    # stay zero and contribute 0 to the sum.
    pred = x.reshape(n, 2).astype(in_dtype)
    gt = y.reshape(n, 3).astype(in_dtype)
    data = jnp.zeros((5, padded), in_dtype)
    data = data.at[0:2, :n].set(pred.T)
    data = data.at[2:5, :n].set(gt.T)
    data = data.reshape(5, padded_rows, LANE)

    def _in_index_map(i, k):
        return (0, i * steps_per_core + k, 0)

    def _out_index_map(i, k):
        return (i, 0, 0)

    partials = pl.pallas_call(
        _mpjpe2d_kernel,
        out_shape=jax.ShapeDtypeStruct((2, 8, LANE), jnp.float32),
        grid_spec=pltpu.PrefetchScalarGridSpec(
            num_scalar_prefetch=0,
            grid=(2, steps_per_core),
            in_specs=[pl.BlockSpec((5, tr, LANE), _in_index_map)],
            out_specs=pl.BlockSpec((1, 8, LANE), _out_index_map),
        ),
        compiler_params=pltpu.CompilerParams(
            dimension_semantics=("parallel", "arbitrary"),
            vmem_limit_bytes=32 * 1024 * 1024,
        ),
    )(data)

    # Final cross-lane reduce + 1/n scale (once, outside the grid).
    return (jnp.sum(partials) / jnp.float32(n)).astype(jnp.float32)


def mpjpe_2d_reference(x, y):
    """Pure-JAX mirror of the PyTorch forward."""
    b, f, j, d = x.shape
    pred = x.reshape(-1, j, 2).astype(jnp.float32)
    gt = y.reshape(-1, j, 3).astype(jnp.float32)
    diff = jnp.sqrt(jnp.sum((pred - gt[..., :2]) ** 2, axis=2) * gt[:, :, 2])
    diff = jnp.mean(diff, axis=1)
    return jnp.mean(diff)


if __name__ == "__main__":
    key = jax.random.PRNGKey(0)
    k1, k2, k3 = jax.random.split(key, 3)

    # Small but enough flattened joints (2*64*17 = 2176) for a multi-step grid:
    # rows=17 -> tr=8, padded_rows=32 -> grid (2, 2).
    B, F, J = 2, 64, 17
    x = jax.random.normal(k1, (B, F, J, 2), dtype=jnp.float32)
    gt_xy = x + 0.1 * jax.random.normal(k2, (B, F, J, 2), dtype=jnp.float32)
    conf = jax.random.uniform(k3, (B, F, J, 1), dtype=jnp.float32)  # non-negative
    y = jnp.concatenate([gt_xy, conf], axis=-1)                     # [B, F, J, 3]

    out = jax.block_until_ready(mpjpe_2d_pallas(x, y))
    ref = jax.block_until_ready(mpjpe_2d_reference(x, y))

    assert jnp.allclose(out, ref, atol=1e-5, rtol=1e-5), (out, ref)
    print("KERNEL_OK")
</pallas_src>

<mosaic_0001>
module attributes {stable_mosaic.version = 11 : i64} {
  func.func @_mpjpe2d_kernel(%arg0: i32, %arg1: i32, %arg2: memref<5x8x128xf32, #tpu.memory_space<vmem>>, %arg3: memref<1x8x128xf32, #tpu.memory_space<vmem>>) attributes {dimension_semantics = [#tpu.dimension_semantics<parallel>, #tpu.dimension_semantics<arbitrary>], iteration_bounds = array<i64: 2, 2>, scalar_prefetch = 0 : i64, scratch_operands = 0 : i64, tpu.core_type = #tpu.core_type<tc>, window_params = [{transform_indices = @transform_0, window_bounds = array<i64: 5, 8, 128>}, {transform_indices = @transform_1, window_bounds = array<i64: 1, 8, 128>}]} {
    %c0_i32 = arith.constant 0 : i32
    %0 = arith.cmpi eq, %arg1, %c0_i32 : i32
    %1 = arith.extui %0 : i1 to i32
    %c0_i32_0 = arith.constant 0 : i32
    %2 = arith.cmpi ne, %1, %c0_i32_0 : i32
    scf.if %2 {
      %cst_17 = arith.constant 0.000000e+00 : f32
      %26 = vector.broadcast %cst_17 : f32 to vector<1x8x128xf32>
      %c0_18 = arith.constant 0 : index
      %c0_19 = arith.constant 0 : index
      %c0_20 = arith.constant 0 : index
      %27 = vector.load %arg3[%c0_18, %c0_19, %c0_20] : memref<1x8x128xf32, #tpu.memory_space<vmem>>, vector<1x8x128xf32>
      tpu.vector_store %arg3[%c0_18, %c0_19, %c0_20], %26 {strides = array<i32>} : memref<1x8x128xf32, #tpu.memory_space<vmem>>, vector<1x8x128xf32>,
    } else {
    }
    %c0 = arith.constant 0 : index
    %c0_1 = arith.constant 0 : index
    %c0_2 = arith.constant 0 : index
    %3 = vector.load %arg2[%c0, %c0_1, %c0_2] : memref<5x8x128xf32, #tpu.memory_space<vmem>>, vector<1x8x128xf32>
    %4 = vector.shape_cast %3 : vector<1x8x128xf32> to vector<8x128xf32>
    %c1 = arith.constant 1 : index
    %c0_3 = arith.constant 0 : index
    %c0_4 = arith.constant 0 : index
    %5 = vector.load %arg2[%c1, %c0_3, %c0_4] : memref<5x8x128xf32, #tpu.memory_space<vmem>>, vector<1x8x128xf32>
    %6 = vector.shape_cast %5 : vector<1x8x128xf32> to vector<8x128xf32>
    %c2 = arith.constant 2 : index
    %c0_5 = arith.constant 0 : index
    %c0_6 = arith.constant 0 : index
    %7 = vector.load %arg2[%c2, %c0_5, %c0_6] : memref<5x8x128xf32, #tpu.memory_space<vmem>>, vector<1x8x128xf32>
    %8 = vector.shape_cast %7 : vector<1x8x128xf32> to vector<8x128xf32>
    %c3 = arith.constant 3 : index
    %c0_7 = arith.constant 0 : index
    %c0_8 = arith.constant 0 : index
    %9 = vector.load %arg2[%c3, %c0_7, %c0_8] : memref<5x8x128xf32, #tpu.memory_space<vmem>>, vector<1x8x128xf32>
    %10 = vector.shape_cast %9 : vector<1x8x128xf32> to vector<8x128xf32>
    %c4 = arith.constant 4 : index
    %c0_9 = arith.constant 0 : index
    %c0_10 = arith.constant 0 : index
    %11 = vector.load %arg2[%c4, %c0_9, %c0_10] : memref<5x8x128xf32, #tpu.memory_space<vmem>>, vector<1x8x128xf32>
    %12 = vector.shape_cast %11 : vector<1x8x128xf32> to vector<8x128xf32>
    %13 = arith.subf %4, %8 : vector<8x128xf32>
    %14 = arith.subf %6, %10 : vector<8x128xf32>
    %15 = arith.mulf %13, %13 : vector<8x128xf32>
    %16 = arith.mulf %14, %14 : vector<8x128xf32>
    %17 = arith.addf %15, %16 : vector<8x128xf32>
    %18 = arith.mulf %17, %12 : vector<8x128xf32>
    %19 = math.sqrt %18 : vector<8x128xf32>
    %20 = vector.shape_cast %19 : vector<8x128xf32> to vector<1x8x128xf32>
    %cst = arith.constant dense<0.000000e+00> : vector<8x128xf32>
    %21 = vector.multi_reduction <add>, %20, %cst [0] : vector<1x8x128xf32> to vector<8x128xf32>
    %c0_11 = arith.constant 0 : index
    %c0_12 = arith.constant 0 : index
    %c0_13 = arith.constant 0 : index
    %22 = vector.load %arg3[%c0_11, %c0_12, %c0_13] : memref<1x8x128xf32, #tpu.memory_space<vmem>>, vector<1x8x128xf32>
    %23 = vector.shape_cast %21 : vector<8x128xf32> to vector<1x8x128xf32>
    %24 = arith.addf %22, %23 : vector<1x8x128xf32>
    %c0_14 = arith.constant 0 : index
    %c0_15 = arith.constant 0 : index
    %c0_16 = arith.constant 0 : index
    %25 = vector.load %arg3[%c0_14, %c0_15, %c0_16] : memref<1x8x128xf32, #tpu.memory_space<vmem>>, vector<1x8x128xf32>
    tpu.vector_store %arg3[%c0_14, %c0_15, %c0_16], %24 {strides = array<i32>} : memref<1x8x128xf32, #tpu.memory_space<vmem>>, vector<1x8x128xf32>,
    return
  }
  func.func @transform_0(%arg0: i32, %arg1: i32) -> (i32, i32, i32) {
    %c2_i32 = arith.constant 2 : i32
    %0 = arith.muli %arg0, %c2_i32 : i32
    %1 = arith.addi %0, %arg1 : i32
    %c0_i32 = arith.constant 0 : i32
    %c0_i32_0 = arith.constant 0 : i32
    %c0_i32_1 = arith.constant 0 : i32
    return %c0_i32, %1, %c0_i32_0 : i32, i32, i32
  }
  func.func @transform_1(%arg0: i32, %arg1: i32) -> (i32, i32, i32) {
    %c0_i32 = arith.constant 0 : i32
    %c0_i32_0 = arith.constant 0 : i32
    %c0_i32_1 = arith.constant 0 : i32
    return %arg0, %c0_i32, %c0_i32_0 : i32, i32, i32
  }
}

</mosaic_0001>

<llo_original>
// kernel: tpu_custom_call.1
$region0: #{tpu_custom_call.1}
  #allocation0 [shape = 'u32[]', space=smem, size = 0x4, offset = 0x4, fixed_abs, tag = 'smem constant byte address 0x4 - core index']
  #allocation1 [shape = 'u32[144,128]{1,0:T(1,128)}', space=vmem, size = 0x12000, scoped, tag = 'internal scratch']
  %s0 = inlined_call_operand.hbm [shape: f32[5,32,128], index: 0, kind: input, shape index: {}]
  %s1 = inlined_call_operand.hbm [shape: f32[2,8,128], index: 1, kind: output, shape index: {}]
  %s2 = sld [smem:[#allocation0]]
  $region45: #{tpu_custom_call.1} parent=0
    _
  %s4 = ssub.s32 1, %s2
  %s5 = scalar_select 0, %s4, %s2
  $region1: #{tpu_custom_call.1} parent=0
    #allocation2 [shape = 'u8[40960]{0}', space=vmem, size = 0xa000, scoped, tag = 'input window, operand 0']
    #allocation3 [shape = 's32[2]{0}', space=sflag, size = 0x8, scoped, tag = 'scoped memory for tpu_custom_call.1']
    #allocation4 [shape = 's32[2]{0}', space=sflag, size = 0x8, scoped, tag = 'scoped memory for tpu_custom_call.1']
    #allocation5 [shape = 'u8[8192]{0}', space=vmem, size = 0x2000, scoped, tag = 'output window, operand 0']
    %6 = vsyncpa [#allocation3], 0
    %s7 = scalar_lea.sflag [#allocation3], 1
    %8 = vsyncpa %s7, 0
    %9 = vsyncpa [#allocation4], 0
    %s10 = scalar_lea.sflag [#allocation4], 1
    %11 = vsyncpa %s10, 0
    loop: start=0, step=1, limit=6
    $region2: #{tpu_custom_call.1} parent=1 // loop_pre_header
      _
    $region3: #{tpu_custom_call.1} parent=1 // loop_header
      %s13 = sphi 0, %s17
      %p14 = scmp.ge.s32.totalorder %s13, 6
      %s20 = sphi 0, %s32
      %s21 = sphi 0, %s28
      %s22 = sphi 0, %s20
      %s23 = sphi 0, %s21
      %s24 = sphi 0, %s22
      %s25 = sphi 0, %s23
      %s39 = sphi 0, %s41
      %s42 = sphi 0, %s39
      %s43 = sphi 0, %s42
      %s59 = sphi 0, %s43
      %s65 = sphi 0, %s67
      %s68 = sphi 0, %s65
      %s69 = sphi 0, %s68
      %s85 = sphi 0, %s69
    $region4: #{tpu_custom_call.1} parent=1 // loop_header_branch
      %16 = sbr.rel (%p14) target = $region8
    $region5: #{tpu_custom_call.1} parent=1 // loop_body
      %s18 = ssub.s32 %s13, 1
      %s19 = ssub.s32 %s13, 2
      %s26 = sadd.s32 1, %s21
      %p27 = scmp.ge.s32.totalorder %s26, 2
      %s28 = scalar_select %p27, 0, %s26
      %s29 = sadd.s32 1, %s20
      %s30 = scalar_select %p27, %s29, %s20
      %p31 = scmp.ge.s32.totalorder %s30, 2
      %s32 = scalar_select %p31, 0, %s30
      %s33 = smul.u32 %s20, 2
      %s34 = sadd.s32 %s33, %s21
      %s35 = smul.u32 %s32, 2
      %s36 = sadd.s32 %s35, %s28
      %s37 = ssub.s32 %s34, %s36
      %p38 = scmp.eq.s32.totalorder %s37, 0
      %s40 = sadd.s32 %s39, 1
      %s41 = scalar_select %p38, %s39, %s40
      %p44 = pneg %p38
      %p45 = scmp.eq.s32.totalorder %s13, 3
      %p46 = por %p44, %p45
      %p47 = scmp.ne.s32.totalorder %s39, %s42
      %p48 = scmp.eq.s32.totalorder %s13, 0
      %p49 = por %p47, %p48
      %p50 = scmp.ne.s32.totalorder %s39, %s42
      %p51 = scmp.eq.s32.totalorder %s18, 3
      %p52 = por %p50, %p51
      %p53 = scmp.ne.s32.totalorder %s42, %s43
      %p54 = scmp.eq.s32.totalorder %s18, 0
      %p55 = por %p53, %p54
      %p56 = scmp.ne.s32.totalorder %s42, %s43
      %p57 = scmp.eq.s32.totalorder %s19, 3
      %p58 = por %p56, %p57
      %p60 = scmp.ne.s32.totalorder %s43, %s59
      %p61 = scmp.eq.s32.totalorder %s19, 0
      %p62 = por %p60, %p61
      %s63 = ssub.s32 %s20, %s32
      %p64 = scmp.eq.s32.totalorder %s63, 0
      %s66 = sadd.s32 %s65, 1
      %s67 = scalar_select %p64, %s65, %s66
      %p70 = pneg %p64
      %p71 = scmp.eq.s32.totalorder %s13, 3
      %p72 = por %p70, %p71
      %p73 = scmp.ne.s32.totalorder %s65, %s68
      %p74 = scmp.eq.s32.totalorder %s13, 0
      %p75 = por %p73, %p74
      %p76 = scmp.ne.s32.totalorder %s65, %s68
      %p77 = scmp.eq.s32.totalorder %s18, 3
      %p78 = por %p76, %p77
      %p79 = scmp.ne.s32.totalorder %s68, %s69
      %p80 = scmp.eq.s32.totalorder %s18, 0
      %p81 = por %p79, %p80
      %p82 = scmp.ne.s32.totalorder %s68, %s69
      %p83 = scmp.eq.s32.totalorder %s19, 3
      %p84 = por %p82, %p83
      %p86 = scmp.ne.s32.totalorder %s69, %s85
      %p87 = scmp.eq.s32.totalorder %s19, 0
      %p88 = por %p86, %p87
      %p89 = scmp.le.s32.totalorder 1, %s13
      %p90 = scmp.lt.s32.totalorder %s13, 5
      %p91 = pnand %p89, %p90
      %p92 = pneg %p91
      // Predicated region
      $region9: #{tpu_custom_call.1} parent=5 // pred_check
        _
      $region10: #{tpu_custom_call.1} parent=5 // pred_check_branch
        %94 = sbr.rel (%p91) target = $region12
      $region11: #{tpu_custom_call.1} parent=5 // pred_region
        %s95 = ssub.s32 %s13, 1
      $region12: #{tpu_custom_call.1} parent=5 // pred_fallthru
        _
      %p96 = scmp.lt.s32.totalorder %s13, 4
      // Predicated region
      $region13: #{tpu_custom_call.1} parent=5 // pred_check
        %p97 = pneg %p96
      $region14: #{tpu_custom_call.1} parent=5 // pred_check_branch
        %99 = sbr.rel (%p97) target = $region16
      $region15: #{tpu_custom_call.1} parent=5 // pred_region
        // Predicated region
        $region17: #{tpu_custom_call.1} parent=15 // pred_check
          %p100 = pneg %p49
        $region18: #{tpu_custom_call.1} parent=15 // pred_check_branch
          %102 = sbr.rel (%p100) target = $region20
        $region19: #{tpu_custom_call.1} parent=15 // pred_region
          %s103 = sand.u32 %s39, 1
          %s104 = scalar_lea.sflag [#allocation3], %s103
          %s105 = sand.u32 %s39, 1
          %s106 = smul.addr %s105, 40
          %s107 = scalar_lea.vmem [#allocation2], %s106
          %s108 = smul.u32 %s20, 2
          %s109 = sadd.s32 %s108, %s21
          %s111 = ssub.s32 640, 640
          %112 = vsyncadd %s104, %s111
          %s113 = smul.addr %s109, 128
          %s114 = scalar_lea.hbm %s0, %s113
          %s115 = sshll.u32 %s107, 4
          %s116 = int_to_ptr.vmem [resolvable:$true] %s115
          %121 = dma.hbm_to_vmem [thread:$0]  %s114, 640, %s116, %s104, 512, 128, 8
        $region20: #{tpu_custom_call.1} parent=15 // pred_fallthru
          _
      $region16: #{tpu_custom_call.1} parent=5 // pred_fallthru
        _
      %p122 = scmp.le.s32.totalorder 1, %s13
      %p123 = scmp.lt.s32.totalorder %s13, 5
      %p124 = pnand %p122, %p123
      %p125 = pneg %p124
      // Predicated region
      $region21: #{tpu_custom_call.1} parent=5 // pred_check
        _
      $region22: #{tpu_custom_call.1} parent=5 // pred_check_branch
        %127 = sbr.rel (%p124) target = $region24
      $region23: #{tpu_custom_call.1} parent=5 // pred_region
        %s128 = ssub.s32 %s13, 1
        %s129 = sand.u32 %s42, 1
        %s130 = scalar_lea.sflag [#allocation3], %s129
        %s131 = sand.u32 %s42, 1
        %s132 = smul.addr %s131, 40
        %s133 = scalar_lea.vmem [#allocation2], %s132
        // Predicated region
        $region25: #{tpu_custom_call.1} parent=23 // pred_check
          %p134 = pneg %p55
        $region26: #{tpu_custom_call.1} parent=23 // pred_check_branch
          %136 = sbr.rel (%p134) target = $region28
        $region27: #{tpu_custom_call.1} parent=23 // pred_region
          %137 = dma.done %s130, 640
        $region28: #{tpu_custom_call.1} parent=23 // pred_fallthru
          _
        %s138 = sand.u32 %s42, 1
        %s139 = scalar_lea.sflag [#allocation3], %s138
        %s140 = sand.u32 %s42, 1
        %s141 = smul.addr %s140, 40
        %s142 = scalar_lea.vmem [#allocation2], %s141
        %p143 = pneg %p55
        %p144 = pneg %p52
        %p145 = pneg %p81
        %p146 = pneg %p78
        %s147 = sand.u32 %s68, 1
        %s148 = scalar_lea.sflag [#allocation4], %s147
        %s149 = sand.u32 %s68, 1
        %s150 = smul.addr %s149, 8
        %s151 = scalar_lea.vmem [#allocation5], %s150
        %s152 = smul.u32 %s22, 2
        %s153 = sadd.s32 %s152, %s23
        %p154 = scmp.eq.s32.totalorder %s23, 0
        // Predicated region
        $region29: #{tpu_custom_call.1} parent=23 // pred_check
          %p155 = pneg %p154
        $region30: #{tpu_custom_call.1} parent=23 // pred_check_branch
          %157 = sbr.rel (%p155) target = $region32
        $region31: #{tpu_custom_call.1} parent=23 // pred_region
          %158 = vst [vmem:[%s151] sm:$0xff] 0.0
        $region32: #{tpu_custom_call.1} parent=23 // pred_fallthru
          _
        %v159 = vld [vmem:[%s133] sm:$0xff]
        %s160 = scalar_lea.vmem %s133, 8 [#allocation2]
        %v161 = vld [vmem:[%s160] sm:$0xff]
        %s162 = scalar_lea.vmem %s133, 16 [#allocation2]
        %v163 = vld [vmem:[%s162] sm:$0xff]
        %s164 = scalar_lea.vmem %s133, 24 [#allocation2]
        %v165 = vld [vmem:[%s164] sm:$0xff]
        %s166 = scalar_lea.vmem %s133, 32 [#allocation2]
        %v167 = vld [vmem:[%s166] sm:$0xff]
        %v168 = vsub.f32 %v159, %v163
        %v169 = vsub.f32 %v161, %v165
        %v170 = vmul.f32 %v168, %v168
        %v171 = vmul.f32 %v169, %v169
        %v172 = vadd.f32 %v170, %v171
        %v173 = vmul.f32 %v172, %v167
        %v174 = vrsqrt.pop %v173
        %v175 = vmul.f32 %v173, %v174
        %vm176 = vcmp.eq.f32.partialorder %v173, inf
        %v177 = vsel %vm176, %v173, %v175
        %vm178 = vcmp.eq.f32.partialorder %v173, 0.0
        %v179 = vand.u32 %v173, 2147483648
        %v180 = vsel %vm178, %v179, %v177
        %v181 = vadd.f32 %v180, 0.0
        %v182 = vld [vmem:[%s151] sm:$0xff]
        %v183 = vadd.f32 %v182, %v181
        %184 = vst [vmem:[%s151] sm:$0xff] %v183
        %s185 = sand.u32 %s68, 1
        %s186 = scalar_lea.sflag [#allocation4], %s185
        %s187 = sand.u32 %s68, 1
        %s188 = smul.addr %s187, 8
        %s189 = scalar_lea.vmem [#allocation5], %s188
        // Predicated region
        $region33: #{tpu_custom_call.1} parent=23 // pred_check
          %p190 = pneg %p78
        $region34: #{tpu_custom_call.1} parent=23 // pred_check_branch
          %192 = sbr.rel (%p190) target = $region36
        $region35: #{tpu_custom_call.1} parent=23 // pred_region
          %s194 = ssub.s32 128, 128
          %195 = vsyncadd %s186, %s194
          %s196 = smul.addr %s22, 128
          %s197 = scalar_lea.hbm %s1, %s196
          %s199 = sshll.u32 %s189, 4
          %s200 = int_to_ptr.vmem [resolvable:$true] %s199
          %202 = dma.vmem_to_hbm [thread:$0]  %s200, 128, %s197, %s186
        $region36: #{tpu_custom_call.1} parent=23 // pred_fallthru
          _
      $region24: #{tpu_custom_call.1} parent=5 // pred_fallthru
        _
      %p203 = scmp.le.s32.totalorder 2, %s13
      // Predicated region
      $region37: #{tpu_custom_call.1} parent=5 // pred_check
        %p204 = pneg %p203
      $region38: #{tpu_custom_call.1} parent=5 // pred_check_branch
        %206 = sbr.rel (%p204) target = $region40
      $region39: #{tpu_custom_call.1} parent=5 // pred_region
        %s207 = ssub.s32 %s13, 2
        // Predicated region
        $region41: #{tpu_custom_call.1} parent=39 // pred_check
          %p208 = pneg %p84
        $region42: #{tpu_custom_call.1} parent=39 // pred_check_branch
          %210 = sbr.rel (%p208) target = $region44
        $region43: #{tpu_custom_call.1} parent=39 // pred_region
          %s211 = sand.u32 %s69, 1
          %s212 = scalar_lea.sflag [#allocation4], %s211
          %s213 = sand.u32 %s69, 1
          %s214 = smul.addr %s213, 8
          %s215 = scalar_lea.vmem [#allocation5], %s214
          %216 = dma.done %s212, 128
        $region44: #{tpu_custom_call.1} parent=39 // pred_fallthru
          _
      $region40: #{tpu_custom_call.1} parent=5 // pred_fallthru
        _
    $region6: #{tpu_custom_call.1} parent=1 // loop_footer
      %s17 = sadd.s32 1, %s13
    $region7: #{tpu_custom_call.1} parent=1 // loop_footer_branch
      %12 = sbr.rel target = $region3
    $region8: #{tpu_custom_call.1} parent=1 // loop_exit
      _
    %217 = vsyncpa [#allocation3], 1
    %s218 = scalar_lea.sflag [#allocation3], 1
    %219 = vsyncpa %s218, 1
    %220 = vsyncpa [#allocation4], 1
    %s221 = scalar_lea.sflag [#allocation4], 1
    %222 = vsyncpa %s221, 1

</llo_original>
